<compile_context>
chip_gen: v7x
topology: tpu7x:2x2x1
jax: 0.10.0
libtpu: 0.0.40
codegen_flags: <defaults>
</compile_context>

<pallas_src>
import functools
import math

import jax
import jax.numpy as jnp
from jax import lax
from jax.experimental import pallas as pl
from jax.experimental.pallas import tpu as pltpu


# ------------------------------- helpers -------------------------------------

def _pick_tile(length, target):
    """Largest multiple-of-8 divisor of `length` not exceeding `target`
    (falls back to the full length, which is always a legal block)."""
    if length <= target:
        return length
    t = target - (target % 8)
    while t >= 8:
        if length % t == 0:
            return t
        t -= 8
    return length


def _vmem_capacity_bytes():
    try:
        return int(pltpu.get_tpu_info().vmem_capacity_bytes)
    except Exception:
        return 64 * 1024 * 1024          # conservative (v7x-sized) fallback


# --------------------------- stage 1: input 1x1 conv -------------------------

def _inproj_kernel(x_ref, w_ref, b_ref, o_ref, *, dtype_mxu):
    x = x_ref[0].astype(dtype_mxu)
    o_ref[0] = (jnp.dot(x, w_ref[...].astype(dtype_mxu),
                        preferred_element_type=jnp.float32)
                + b_ref[...]).astype(o_ref.dtype)


# --------------------------- stage 2: fused decoder ---------------------------

def _decoder_kernel(feat0_ref, f_ref, mcol_ref, logmrow_ref,
                    wff_ref, bff_ref, wqk_ref, bqk_ref,
                    wv_ref, bv_ref, wo_ref, bo_ref, w1_ref, b1_ref,
                    w_out_ref, b_out_ref,
                    out_ref, feat_ref,
                    xpad_ref, q_sc, outv_sc,
                    *, num_layers, cq, cv, q_tile, pad, dtype_mxu):
    f32 = jnp.float32
    feat = feat0_ref[0].astype(f32)        # (L, C)  projected input, stays resident
    f = f_ref[0]                           # (L, C)  encoder features (value source)
    mcol = mcol_ref[0]                     # (L, 1)  padding mask (column form)
    logmrow = logmrow_ref[0]               # (1, L)  precomputed log(mask + 1e-6)
    L, C = feat.shape

    def mm(a, w):                          # MXU matmul, operands dtype_mxu, f32 accum
        return jnp.dot(a.astype(dtype_mxu), w.astype(dtype_mxu),
                       preferred_element_type=f32)

    # zero ONLY the 2*pad halo rows of the dilated-conv staging buffer (once)
    zero_rows = jnp.zeros((pad, C), dtype=xpad_ref.dtype)
    xpad_ref[pl.ds(0, pad), :] = zero_rows
    xpad_ref[pl.ds(pad + L, pad), :] = zero_rows

    # all per-layer value projections fused into ONE lane-dense matmul;
    # key-side attention mask folded into the value rows.
    v_all = (mm(f, wv_ref[...]) + bv_ref[...]) * mcol            # (L, NL*Cv)

    nq = L // q_tile

    for i in range(num_layers):
        d = 2 ** i

        # ---- _ConvFeedForward: dilated Conv1d(k=3, padding=d) + ReLU, ONE matmul
        xpad_ref[pl.ds(pad, L), :] = feat.astype(xpad_ref.dtype)
        xm = xpad_ref[pl.ds(pad - d, L), :]      # rows t-d (zeros where t < d)
        xp = xpad_ref[pl.ds(pad + d, L), :]      # rows t+d (zeros where t >= L-d)
        x3 = jnp.concatenate([xm, feat, xp], axis=-1)            # (L, 3C)
        ff = mm(x3, wff_ref[i]) + bff_ref[i]
        ff = jnp.maximum(ff, 0.0)

        # ---- InstanceNorm1d over L: single pass (var = E[x^2] - mean^2, eps=1e-5)
        mean = jnp.mean(ff, axis=0, keepdims=True)
        var = jnp.maximum(jnp.mean(ff * ff, axis=0, keepdims=True) - mean * mean,
                          0.0)
        xn = (ff - mean) * lax.rsqrt(var + 1e-5)

        # ---- fused q/k projection (1/sqrt(Cq) pre-folded into wq/bq) ----------
        qk = mm(xn, wqk_ref[i]) + bqk_ref[i]
        q_sc[...] = qk[:, :cq].astype(q_sc.dtype)
        kkT = jnp.transpose(qk[:, cq:]).astype(dtype_mxu)        # (Cq, L), hoisted
        v_i = v_all[:, i * cv:(i + 1) * cv].astype(dtype_mxu)    # (L, Cv)

        # ---- scalar-dot attention: query-tiled fori_loop into a VMEM scratch ---
        def att_body(t, carry, kkT=kkT, v_i=v_i):
            qs = pl.multiple_of(t * q_tile, q_tile)
            qt = q_sc[pl.ds(qs, q_tile), :]                      # (TQ, Cq)
            logits = jnp.dot(qt, kkT, preferred_element_type=f32) + logmrow
            logits = logits - jnp.max(logits, axis=-1, keepdims=True)
            p = jnp.exp(logits)
            denom = jnp.sum(p, axis=-1, keepdims=True)
            att = p * pl.reciprocal(denom, approx=True)          # EUP slot
            outv_sc[pl.ds(qs, q_tile), :] = jnp.dot(
                att.astype(dtype_mxu), v_i, preferred_element_type=f32)
            return carry
        lax.fori_loop(0, nq, att_body, 0)
        # TODO(synk): flash-style key tiling (online softmax) for very long L.
        outv = outv_sc[...]                                      # (L, Cv)

        # ---- conv_out(relu(.)), alpha pre-folded, query-side mask --------------
        att_out = (mm(jnp.maximum(outv, 0.0), wo_ref[i]) + bo_ref[i]) * mcol

        # ---- _AttModule tail: 1x1 conv, dropout(identity), residual + mask -----
        mix = mm(att_out + ff, w1_ref[i]) + b1_ref[i]
        # TODO(synk): nn.Dropout omitted (inference/eval semantics -> identity)
        feat = (feat + mix) * mcol

    feat_ref[0] = feat.astype(feat_ref.dtype)
    out_cls = (mm(feat, w_out_ref[...]) + b_out_ref[...]) * mcol   # lane-dense
    out_ref[0] = out_cls.astype(out_ref.dtype)


# ------------------------------ wrapper ---------------------------------------

def decoder_forward(x, fencoder, mask, params, alpha, *,
                    compute_dtype=jnp.bfloat16, q_tile=None):
    """_Decoder.forward. Inputs/outputs use the PyTorch NCL layout.

    x: (B, input_dim, L); fencoder: (B, num_f_maps, L); mask: (B, 1, L)
    returns (out (B, num_classes, L), feature (B, num_f_maps, L))
    """
    B, Din, L = x.shape
    C = fencoder.shape[1]
    num_classes = params["w_out"].shape[1]
    layers = params["layers"]
    NL = len(layers)
    Cq = layers[0]["wq"].shape[1]
    Cv = layers[0]["wv"].shape[1]
    scale = 1.0 / math.sqrt(Cq)
    wdt = compute_dtype
    f32 = jnp.float32

    # generation-aware tiling / VMEM budget (v7x: 64 MiB, v5e/v6e: 128 MiB)
    vmem_cap = _vmem_capacity_bytes()
    vmem_limit = int(min(100 * 1024 * 1024, int(vmem_cap * 0.85)))
    if q_tile is None:
        q_tile = 1024 if vmem_cap >= 96 * 1024 * 1024 else 256
    qt = _pick_tile(L, min(q_tile, L))

    # channels-last activations; masks / log-mask stay f32
    xl = jnp.transpose(x, (0, 2, 1)).astype(wdt)
    fl = jnp.transpose(fencoder, (0, 2, 1)).astype(wdt)
    mcol = jnp.transpose(mask[:, 0:1, :], (0, 2, 1)).astype(f32)       # (B, L, 1)
    logmrow = jnp.log(mask[:, 0:1, :].astype(f32) + 1e-6)              # (B, 1, L)

    # -------- parameter prep: all folds/fusions happen once, outside kernels ---
    w_in = params["w_in"].astype(wdt)
    b_in = params["b_in"].astype(f32)
    # 3 dilated-conv taps fused into one (3C, C) matmul per layer
    wff3 = jnp.stack([jnp.concatenate([lp["wff"][0], lp["wff"][1], lp["wff"][2]],
                                      axis=0) for lp in layers]).astype(wdt)
    bff = jnp.stack([lp["bff"] for lp in layers]).astype(f32)
    wqk = jnp.stack([jnp.concatenate([lp["wq"] * scale, lp["wk"]], axis=1)
                     for lp in layers]).astype(wdt)
    bqk = jnp.stack([jnp.concatenate([lp["bq"] * scale, lp["bk"]], axis=1)
                     for lp in layers]).astype(f32)
    # all per-layer value projections fused into one (C, NL*Cv) matmul
    wv_all = jnp.concatenate([lp["wv"] for lp in layers], axis=1).astype(wdt)
    bv_all = jnp.concatenate([lp["bv"] for lp in layers], axis=1).astype(f32)
    wo = jnp.stack([alpha * lp["wo"] for lp in layers]).astype(wdt)    # alpha folded
    bo = jnp.stack([alpha * lp["bo"] for lp in layers]).astype(f32)
    w1 = jnp.stack([lp["w1"] for lp in layers]).astype(wdt)
    b1 = jnp.stack([lp["b1"] for lp in layers]).astype(f32)

    # lane-dense class output: pad Cout to a multiple of 128 with zero weights
    clsp = ((num_classes + 127) // 128) * 128
    w_out = jnp.pad(params["w_out"], ((0, 0), (0, clsp - num_classes))).astype(wdt)
    b_out = jnp.pad(params["b_out"], ((0, 0), (0, clsp - num_classes))).astype(f32)

    vmem_spec = pl.BlockSpec(memory_space=pltpu.MemorySpace.VMEM)      # resident once

    # ---- stage 1: input 1x1 conv, L-tiled (the (L, Din) slab is never resident)
    TL = _pick_tile(L, 512)
    feat0 = pl.pallas_call(
        functools.partial(_inproj_kernel, dtype_mxu=wdt),
        out_shape=jax.ShapeDtypeStruct((B, L, C), f32),
        grid=(B, L // TL),
        in_specs=[pl.BlockSpec((1, TL, Din), lambda b, l: (b, l, 0)),
                  vmem_spec, vmem_spec],
        out_specs=pl.BlockSpec((1, TL, C), lambda b, l: (b, l, 0)),
        compiler_params=pltpu.CompilerParams(
            dimension_semantics=("parallel", "parallel"),
            vmem_limit_bytes=vmem_limit),
    )(xl, w_in, b_in)
    # TODO(synk): for extremely large Din, also tile Din with an accumulator.

    pad = 2 ** (NL - 1)                      # max dilation -> halo size

    kern = functools.partial(_decoder_kernel, num_layers=NL, cq=Cq, cv=Cv,
                             q_tile=qt, pad=pad, dtype_mxu=wdt)

    single = pl.Buffered(1)                  # no pointless double-buffering
    out_pad, feat = pl.pallas_call(
        kern,
        out_shape=(jax.ShapeDtypeStruct((B, L, clsp), f32),
                   jax.ShapeDtypeStruct((B, L, C), f32)),
        grid=(B,),
        in_specs=[
            pl.BlockSpec((1, L, C), lambda b: (b, 0, 0), pipeline_mode=single),
            pl.BlockSpec((1, L, C), lambda b: (b, 0, 0), pipeline_mode=single),
            pl.BlockSpec((1, L, 1), lambda b: (b, 0, 0)),
            pl.BlockSpec((1, 1, L), lambda b: (b, 0, 0)),
            vmem_spec, vmem_spec,            # wff3, bff
            vmem_spec, vmem_spec,            # wqk, bqk
            vmem_spec, vmem_spec,            # wv_all, bv_all
            vmem_spec, vmem_spec,            # wo, bo
            vmem_spec, vmem_spec,            # w1, b1
            vmem_spec, vmem_spec,            # w_out, b_out
        ],
        out_specs=(pl.BlockSpec((1, L, clsp), lambda b: (b, 0, 0)),
                   pl.BlockSpec((1, L, C), lambda b: (b, 0, 0))),
        scratch_shapes=[pltpu.VMEM((L + 2 * pad, C), jnp.float32),   # conv staging
                        pltpu.VMEM((L, Cq), wdt),                    # q scratch
                        pltpu.VMEM((L, Cv), jnp.float32)],           # attn output
        compiler_params=pltpu.CompilerParams(
            dimension_semantics=("parallel",),
            vmem_limit_bytes=vmem_limit),
    )(feat0, fl, mcol, logmrow,
      wff3, bff, wqk, bqk, wv_all, bv_all, wo, bo, w1, b1, w_out, b_out)
    # TODO(synk): with B == 1 on v7x one TensorCore sits idle; split the query
    # tiles across cores for the single-sequence inference case.

    out = jnp.transpose(out_pad[:, :, :num_classes], (0, 2, 1))
    return out, jnp.transpose(feat, (0, 2, 1))


# ------------------------- pure-JAX reference check --------------------------

def ref_decoder(x, fencoder, mask, params, alpha):
    xl = jnp.transpose(x, (0, 2, 1))
    fl = jnp.transpose(fencoder, (0, 2, 1))
    mcol = jnp.transpose(mask[:, 0:1, :], (0, 2, 1))
    mrow = mask[:, 0:1, :]
    feat = jnp.einsum("blc,cd->bld", xl, params["w_in"]) + params["b_in"]
    L = feat.shape[1]
    for i, lp in enumerate(params["layers"]):
        d = 2 ** i
        xpad = jnp.pad(feat, ((0, 0), (d, d), (0, 0)))
        ff = (jnp.einsum("blc,cd->bld", xpad[:, 0:L], lp["wff"][0])
              + jnp.einsum("blc,cd->bld", xpad[:, d:d + L], lp["wff"][1])
              + jnp.einsum("blc,cd->bld", xpad[:, 2 * d:2 * d + L], lp["wff"][2])
              + lp["bff"])
        ff = jnp.maximum(ff, 0.0)
        mean = jnp.mean(ff, axis=1, keepdims=True)
        var = jnp.mean((ff - mean) ** 2, axis=1, keepdims=True)
        xn = (ff - mean) / jnp.sqrt(var + 1e-5)
        q = jnp.einsum("blc,cd->bld", xn, lp["wq"]) + lp["bq"]
        k = jnp.einsum("blc,cd->bld", xn, lp["wk"]) + lp["bk"]
        v = jnp.einsum("blc,cd->bld", fl, lp["wv"]) + lp["bv"]
        energy = jnp.einsum("bic,bjc->bij", q, k) / math.sqrt(q.shape[-1])
        att = jax.nn.softmax(energy + jnp.log(mrow + 1e-6), axis=-1) * mrow
        outv = jnp.einsum("bij,bjc->bic", att, v)
        att_out = (jnp.einsum("bic,cd->bid", jnp.maximum(outv, 0.0), lp["wo"])
                   + lp["bo"]) * mcol
        out = alpha * att_out + ff
        out = jnp.einsum("blc,cd->bld", out, lp["w1"]) + lp["b1"]
        feat = (feat + out) * mcol
    out = (jnp.einsum("blc,cd->bld", feat, params["w_out"]) + params["b_out"]) * mcol
    return jnp.transpose(out, (0, 2, 1)), jnp.transpose(feat, (0, 2, 1))


# ------------------------------- param init ----------------------------------

def init_decoder_params(key, num_layers, r1, r2, num_f_maps, input_dim, num_classes):
    keys = jax.random.split(key, 4 + num_layers)

    def norm(k, shape, scale=0.1):
        return scale * jax.random.normal(k, shape, dtype=jnp.float32)

    C, Cq, Cv = num_f_maps, num_f_maps // r1, num_f_maps // r2
    params = {
        "w_in": norm(keys[0], (input_dim, num_f_maps)),
        "b_in": norm(keys[1], (1, num_f_maps)),
        "w_out": norm(keys[2], (num_f_maps, num_classes)),
        "b_out": norm(keys[3], (1, num_classes)),
        "layers": [],
    }
    for i in range(num_layers):
        lk = jax.random.split(keys[4 + i], 12)
        params["layers"].append(dict(
            wff=norm(lk[0], (3, C, C)), bff=norm(lk[1], (1, C)),
            wq=norm(lk[2], (C, Cq)), bq=norm(lk[3], (1, Cq)),
            wk=norm(lk[4], (C, Cq)), bk=norm(lk[5], (1, Cq)),
            wv=norm(lk[6], (C, Cv)), bv=norm(lk[7], (1, Cv)),
            wo=norm(lk[8], (Cv, C)), bo=norm(lk[9], (1, C)),
            w1=norm(lk[10], (C, C)), b1=norm(lk[11], (1, C)),
        ))
    return params


# ---------------------------------- main --------------------------------------

if __name__ == "__main__":
    key = jax.random.PRNGKey(0)
    B, L = 2, 24
    num_layers, r1, r2 = 2, 2, 2
    num_f_maps, input_dim, num_classes = 32, 16, 5
    alpha = 1.0

    k1, k2, k3 = jax.random.split(key, 3)
    x = jax.random.normal(k1, (B, input_dim, L), dtype=jnp.float32)
    fencoder = jax.random.normal(k2, (B, num_f_maps, L), dtype=jnp.float32)
    mask = jnp.ones((B, 1, L), dtype=jnp.float32)
    mask = mask.at[1, :, L - 6:].set(0.0)     # second sequence has padding

    params = init_decoder_params(k3, num_layers, r1, r2,
                                 num_f_maps, input_dim, num_classes)

    ref_out, ref_feat = ref_decoder(x, fencoder, mask, params, alpha)

    # f32 MXU-operand path (accuracy check vs. pure-JAX reference)
    out, feat = decoder_forward(x, fencoder, mask, params, alpha,
                                compute_dtype=jnp.float32)
    jax.block_until_ready((out, feat))
    assert out.shape == (B, num_classes, L)
    assert feat.shape == (B, num_f_maps, L)
    assert jnp.allclose(out, ref_out, atol=5e-3, rtol=5e-3)
    assert jnp.allclose(feat, ref_feat, atol=5e-3, rtol=5e-3)

    # bf16 MXU-operand path (default on all generations); accumulation stays f32
    out_bf, feat_bf = decoder_forward(x, fencoder, mask, params, alpha)
    jax.block_until_ready((out_bf, feat_bf))
    assert jnp.allclose(out_bf, ref_out, atol=1e-1, rtol=1e-1)
    assert jnp.allclose(feat_bf, ref_feat, atol=1e-1, rtol=1e-1)

    print("KERNEL_OK")
</pallas_src>

<mosaic_0001>
module attributes {stable_mosaic.version = 11 : i64} {
  func.func @_inproj_kernel(%arg0: i32, %arg1: i32, %arg2: memref<1x24x16xf32, #tpu.memory_space<vmem>>, %arg3: memref<16x32xf32, #tpu.memory_space<vmem>>, %arg4: memref<1x32xf32, #tpu.memory_space<vmem>>, %arg5: memref<1x24x32xf32, #tpu.memory_space<vmem>>) attributes {dimension_semantics = [#tpu.dimension_semantics<parallel>, #tpu.dimension_semantics<parallel>], iteration_bounds = array<i64: 2, 1>, scalar_prefetch = 0 : i64, scratch_operands = 0 : i64, tpu.core_type = #tpu.core_type<tc>, window_params = [{transform_indices = @transform_0, window_bounds = array<i64: 1, 24, 16>}, {pipeline_mode = #tpu.pipeline_mode<synchronous>, transform_indices = @transform_1, window_bounds = array<i64: 16, 32>}, {pipeline_mode = #tpu.pipeline_mode<synchronous>, transform_indices = @transform_2, window_bounds = array<i64: 1, 32>}, {transform_indices = @transform_3, window_bounds = array<i64: 1, 24, 32>}]} {
    %c0 = arith.constant 0 : index
    %c0_0 = arith.constant 0 : index
    %c0_1 = arith.constant 0 : index
    %0 = vector.load %arg2[%c0, %c0_0, %c0_1] : memref<1x24x16xf32, #tpu.memory_space<vmem>>, vector<1x24x16xf32>
    %1 = vector.shape_cast %0 : vector<1x24x16xf32> to vector<24x16xf32>
    %c0_2 = arith.constant 0 : index
    %c0_3 = arith.constant 0 : index
    %2 = vector.load %arg3[%c0_2, %c0_3] : memref<16x32xf32, #tpu.memory_space<vmem>>, vector<16x32xf32>
    %cst = arith.constant dense<0.000000e+00> : vector<24x32xf32>
    %3 = tpu.matmul %1, %2, %cst {dimension_numbers = #tpu.dot_dimension_numbers<[1], [0], [0], [1], [0, 0, 1, 1], [], []>} : vector<24x16xf32>, vector<16x32xf32>, vector<24x32xf32> -> vector<24x32xf32>
    %c0_4 = arith.constant 0 : index
    %c0_5 = arith.constant 0 : index
    %4 = vector.load %arg4[%c0_4, %c0_5] : memref<1x32xf32, #tpu.memory_space<vmem>>, vector<1x32xf32>
    %5 = vector.broadcast %4 : vector<1x32xf32> to vector<24x32xf32>
    %6 = arith.addf %3, %5 : vector<24x32xf32>
    %c0_6 = arith.constant 0 : index
    %c0_7 = arith.constant 0 : index
    %c0_8 = arith.constant 0 : index
    %7 = vector.load %arg5[%c0_6, %c0_7, %c0_8] : memref<1x24x32xf32, #tpu.memory_space<vmem>>, vector<1x24x32xf32>
    %8 = vector.shape_cast %7 : vector<1x24x32xf32> to vector<24x32xf32>
    %9 = vector.shape_cast %6 : vector<24x32xf32> to vector<1x24x32xf32>
    tpu.vector_store %arg5[%c0_6, %c0_7, %c0_8], %9 {strides = array<i32>} : memref<1x24x32xf32, #tpu.memory_space<vmem>>, vector<1x24x32xf32>,
    return
  }
  func.func @transform_0(%arg0: i32, %arg1: i32) -> (i32, i32, i32) {
    %c0_i32 = arith.constant 0 : i32
    %c0_i32_0 = arith.constant 0 : i32
    return %arg0, %arg1, %c0_i32 : i32, i32, i32
  }
  func.func @transform_1(%arg0: i32, %arg1: i32) -> (i32, i32) {
    %c0_i32 = arith.constant 0 : i32
    %c0_i32_0 = arith.constant 0 : i32
    %c0_i32_1 = arith.constant 0 : i32
    return %c0_i32, %c0_i32_0 : i32, i32
  }
  func.func @transform_2(%arg0: i32, %arg1: i32) -> (i32, i32) {
    %c0_i32 = arith.constant 0 : i32
    %c0_i32_0 = arith.constant 0 : i32
    %c0_i32_1 = arith.constant 0 : i32
    return %c0_i32, %c0_i32_0 : i32, i32
  }
  func.func @transform_3(%arg0: i32, %arg1: i32) -> (i32, i32, i32) {
    %c0_i32 = arith.constant 0 : i32
    %c0_i32_0 = arith.constant 0 : i32
    return %arg0, %arg1, %c0_i32 : i32, i32, i32
  }
}

</mosaic_0001>

<llo_original>
// kernel: tpu_custom_call.1
$region0: #{tpu_custom_call.1}
  #allocation0 [shape = 'u32[]', space=smem, size = 0x4, offset = 0x4, fixed_abs, tag = 'smem constant byte address 0x4 - core index']
  #allocation1 [shape = 'u32[144,128]{1,0:T(1,128)}', space=vmem, size = 0x12000, scoped, tag = 'internal scratch']
  %s0 = inlined_call_operand.vmem [shape: f32[2,24,16], index: 0, kind: input, shape index: {}]
  %s1 = inlined_call_operand.vmem [shape: f32[16,32], index: 1, kind: input, shape index: {}]
  %s2 = inlined_call_operand.vmem [shape: f32[1,32], index: 2, kind: input, shape index: {}]
  %s3 = inlined_call_operand.hbm [shape: f32[2,24,32], index: 3, kind: output, shape index: {}]
  %s4 = sld [smem:[#allocation0]]
  $region45: #{tpu_custom_call.1} parent=0
    _
  %s6 = ssub.s32 1, %s4
  %s7 = scalar_select 0, %s6, %s4
  $region1: #{tpu_custom_call.1} parent=0
    #allocation2 [shape = 'u8[24576]{0}', space=vmem, size = 0x6000, scoped, tag = 'output window, operand 0']
    #allocation3 [shape = 's32[2]{0}', space=sflag, size = 0x8, scoped, tag = 'scoped memory for tpu_custom_call.1']
    %8 = vsyncpa [#allocation3], 0
    %s9 = scalar_lea.sflag [#allocation3], 1
    %10 = vsyncpa %s9, 0
    loop: start=0, step=1, limit=4
    $region2: #{tpu_custom_call.1} parent=1 // loop_pre_header
      _
    $region3: #{tpu_custom_call.1} parent=1 // loop_header
      %s12 = sphi 0, %s16
      %p13 = scmp.ge.s32.totalorder %s12, 4
      %s19 = sphi 0, %s31
      %s20 = sphi 0, %s27
      %s21 = sphi 0, %s19
      %s22 = sphi 0, %s20
      %s23 = sphi 0, %s21
      %s24 = sphi 0, %s22
      %s36 = sphi 0, %s38
      %s39 = sphi 0, %s36
      %s40 = sphi 0, %s39
      %s56 = sphi 0, %s40
      %s60 = sphi 0, %s60
      %s62 = sphi 0, %s60
      %s63 = sphi 0, %s62
      %s77 = sphi 0, %s63
      %s81 = sphi 0, %s81
      %s83 = sphi 0, %s81
      %s84 = sphi 0, %s83
      %s98 = sphi 0, %s84
      %s106 = sphi 0, %s108
      %s109 = sphi 0, %s106
      %s110 = sphi 0, %s109
      %s126 = sphi 0, %s110
    $region4: #{tpu_custom_call.1} parent=1 // loop_header_branch
      %15 = sbr.rel (%p13) target = $region8
    $region5: #{tpu_custom_call.1} parent=1 // loop_body
      %s17 = ssub.s32 %s12, 1
      %s18 = ssub.s32 %s12, 2
      %s25 = sadd.s32 1, %s20
      %p26 = scmp.ge.s32.totalorder %s25, 1
      %s27 = scalar_select %p26, 0, %s25
      %s28 = sadd.s32 1, %s19
      %s29 = scalar_select %p26, %s28, %s19
      %p30 = scmp.ge.s32.totalorder %s29, 2
      %s31 = scalar_select %p30, 0, %s29
      %s32 = ssub.s32 %s19, %s31
      %s33 = ssub.s32 %s20, %s27
      %s34 = sor.u32 %s32, %s33
      %p35 = scmp.eq.s32.totalorder %s34, 0
      %s37 = sadd.s32 %s36, 1
      %s38 = scalar_select %p35, %s36, %s37
      %p41 = pneg %p35
      %p42 = scmp.eq.s32.totalorder %s12, 1
      %p43 = por %p41, %p42
      %p44 = scmp.ne.s32.totalorder %s36, %s39
      %p45 = scmp.eq.s32.totalorder %s12, 0
      %p46 = por %p44, %p45
      %p47 = scmp.ne.s32.totalorder %s36, %s39
      %p48 = scmp.eq.s32.totalorder %s17, 1
      %p49 = por %p47, %p48
      %p50 = scmp.ne.s32.totalorder %s39, %s40
      %p51 = scmp.eq.s32.totalorder %s17, 0
      %p52 = por %p50, %p51
      %p53 = scmp.ne.s32.totalorder %s39, %s40
      %p54 = scmp.eq.s32.totalorder %s18, 1
      %p55 = por %p53, %p54
      %p57 = scmp.ne.s32.totalorder %s40, %s56
      %p58 = scmp.eq.s32.totalorder %s18, 0
      %p59 = por %p57, %p58
      %s61 = sadd.s32 %s60, 1
      %p64 = scmp.eq.s32.totalorder %s12, 1
      %p65 = scmp.ne.s32.totalorder %s60, %s62
      %p66 = scmp.eq.s32.totalorder %s12, 0
      %p67 = por %p65, %p66
      %p68 = scmp.ne.s32.totalorder %s60, %s62
      %p69 = scmp.eq.s32.totalorder %s17, 1
      %p70 = por %p68, %p69
      %p71 = scmp.ne.s32.totalorder %s62, %s63
      %p72 = scmp.eq.s32.totalorder %s17, 0
      %p73 = por %p71, %p72
      %p74 = scmp.ne.s32.totalorder %s62, %s63
      %p75 = scmp.eq.s32.totalorder %s18, 1
      %p76 = por %p74, %p75
      %p78 = scmp.ne.s32.totalorder %s63, %s77
      %p79 = scmp.eq.s32.totalorder %s18, 0
      %p80 = por %p78, %p79
      %s82 = sadd.s32 %s81, 1
      %p85 = scmp.eq.s32.totalorder %s12, 1
      %p86 = scmp.ne.s32.totalorder %s81, %s83
      %p87 = scmp.eq.s32.totalorder %s12, 0
      %p88 = por %p86, %p87
      %p89 = scmp.ne.s32.totalorder %s81, %s83
      %p90 = scmp.eq.s32.totalorder %s17, 1
      %p91 = por %p89, %p90
      %p92 = scmp.ne.s32.totalorder %s83, %s84
      %p93 = scmp.eq.s32.totalorder %s17, 0
      %p94 = por %p92, %p93
      %p95 = scmp.ne.s32.totalorder %s83, %s84
      %p96 = scmp.eq.s32.totalorder %s18, 1
      %p97 = por %p95, %p96
      %p99 = scmp.ne.s32.totalorder %s84, %s98
      %p100 = scmp.eq.s32.totalorder %s18, 0
      %p101 = por %p99, %p100
      %s102 = ssub.s32 %s19, %s31
      %s103 = ssub.s32 %s20, %s27
      %s104 = sor.u32 %s102, %s103
      %p105 = scmp.eq.s32.totalorder %s104, 0
      %s107 = sadd.s32 %s106, 1
      %s108 = scalar_select %p105, %s106, %s107
      %p111 = pneg %p105
      %p112 = scmp.eq.s32.totalorder %s12, 1
      %p113 = por %p111, %p112
      %p114 = scmp.ne.s32.totalorder %s106, %s109
      %p115 = scmp.eq.s32.totalorder %s12, 0
      %p116 = por %p114, %p115
      %p117 = scmp.ne.s32.totalorder %s106, %s109
      %p118 = scmp.eq.s32.totalorder %s17, 1
      %p119 = por %p117, %p118
      %p120 = scmp.ne.s32.totalorder %s109, %s110
      %p121 = scmp.eq.s32.totalorder %s17, 0
      %p122 = por %p120, %p121
      %p123 = scmp.ne.s32.totalorder %s109, %s110
      %p124 = scmp.eq.s32.totalorder %s18, 1
      %p125 = por %p123, %p124
      %p127 = scmp.ne.s32.totalorder %s110, %s126
      %p128 = scmp.eq.s32.totalorder %s18, 0
      %p129 = por %p127, %p128
      %p130 = scmp.le.s32.totalorder 1, %s12
      %p131 = scmp.lt.s32.totalorder %s12, 3
      %p132 = pnand %p130, %p131
      %p133 = pneg %p132
      // Predicated region
      $region9: #{tpu_custom_call.1} parent=5 // pred_check
        _
      $region10: #{tpu_custom_call.1} parent=5 // pred_check_branch
        %135 = sbr.rel (%p132) target = $region12
      $region11: #{tpu_custom_call.1} parent=5 // pred_region
        %s136 = ssub.s32 %s12, 1
        // Predicated region
        $region13: #{tpu_custom_call.1} parent=11 // pred_check
          %p137 = pneg %p73
        $region14: #{tpu_custom_call.1} parent=11 // pred_check_branch
          %139 = sbr.rel (%p137) target = $region16
        $region15: #{tpu_custom_call.1} parent=11 // pred_region
          _
        $region16: #{tpu_custom_call.1} parent=11 // pred_fallthru
          _
        // Predicated region
        $region17: #{tpu_custom_call.1} parent=11 // pred_check
          %p140 = pneg %p94
        $region18: #{tpu_custom_call.1} parent=11 // pred_check_branch
          %142 = sbr.rel (%p140) target = $region20
        $region19: #{tpu_custom_call.1} parent=11 // pred_region
          _
        $region20: #{tpu_custom_call.1} parent=11 // pred_fallthru
          _
      $region12: #{tpu_custom_call.1} parent=5 // pred_fallthru
        _
      %p143 = scmp.lt.s32.totalorder %s12, 2
      // Predicated region
      $region21: #{tpu_custom_call.1} parent=5 // pred_check
        %p144 = pneg %p143
      $region22: #{tpu_custom_call.1} parent=5 // pred_check_branch
        %146 = sbr.rel (%p144) target = $region24
      $region23: #{tpu_custom_call.1} parent=5 // pred_region
        // Predicated region
        $region25: #{tpu_custom_call.1} parent=23 // pred_check
          %p147 = pneg %p46
        $region26: #{tpu_custom_call.1} parent=23 // pred_check_branch
          %149 = sbr.rel (%p147) target = $region28
        $region27: #{tpu_custom_call.1} parent=23 // pred_region
          %s150 = smul.u32 3, %s20
          %p151 = scmp.lt.s32.totalorder %s19, 1
          %s152 = scalar_select %p151, %s19, 1
          %p153 = scmp.lt.s32.totalorder %s150, 2
          %s154 = scalar_select %p153, %s150, 2
          %s155 = smul.addr %s152, 3
          %s156 = sadd.s32 %s154, %s155
          %s157 = smul.addr %s156, 8
          %s158 = scalar_lea.vmem %s0, %s157
          %s159 = smul.u32 3, %s20
        $region28: #{tpu_custom_call.1} parent=23 // pred_fallthru
          _
      $region24: #{tpu_custom_call.1} parent=5 // pred_fallthru
        _
      %p160 = scmp.le.s32.totalorder 1, %s12
      %p161 = scmp.lt.s32.totalorder %s12, 3
      %p162 = pnand %p160, %p161
      %p163 = pneg %p162
      // Predicated region
      $region29: #{tpu_custom_call.1} parent=5 // pred_check
        _
      $region30: #{tpu_custom_call.1} parent=5 // pred_check_branch
        %165 = sbr.rel (%p162) target = $region32
      $region31: #{tpu_custom_call.1} parent=5 // pred_region
        %s166 = ssub.s32 %s12, 1
        %s167 = smul.u32 3, %s22
        %p168 = scmp.lt.s32.totalorder %s21, 1
        %s169 = scalar_select %p168, %s21, 1
        %p170 = scmp.lt.s32.totalorder %s167, 2
        %s171 = scalar_select %p170, %s167, 2
        %s172 = smul.addr %s169, 3
        %s173 = sadd.s32 %s171, %s172
        %s174 = smul.addr %s173, 8
        %s175 = scalar_lea.vmem %s0, %s174
        %p176 = pneg %p52
        %p177 = pneg %p49
        %p178 = pneg %p73
        %p179 = pneg %p70
        %p180 = pneg %p94
        %p181 = pneg %p91
        %p182 = pneg %p122
        %p183 = pneg %p119
        %s184 = sand.u32 %s109, 1
        %s185 = scalar_lea.sflag [#allocation3], %s184
        %s186 = sand.u32 %s109, 1
        %s187 = smul.addr %s186, 24
        %s188 = scalar_lea.vmem [#allocation2], %s187
        %s189 = smul.u32 3, %s22
        %p190 = scmp.lt.s32.totalorder %s21, 1
        %s191 = scalar_select %p190, %s21, 1
        %p192 = scmp.lt.s32.totalorder %s189, 2
        %s193 = scalar_select %p192, %s189, 2
        %s194 = smul.addr %s191, 3
        %s195 = sadd.s32 %s193, %s194
        %s196 = smul.addr %s195, 8
        %s197 = scalar_lea.vmem %s0, %s196
        %s198 = smul.u32 3, %s22
        %s199 = smul.u32 3, %s22
        %v200 = vld [vmem:[%s197] sm:$0xff]
        %v201 = vld [vmem:[%s197 + $0x8] sm:$0xff]
        %v202 = vld [vmem:[%s197 + $0x10] sm:$0xff]
        %v203 = vld [vmem:[%s1] sm:$0xff]
        %v204 = vld [vmem:[%s1 + $0x8] sm:$0xff]
        %v205 = vld [vmem:[%s2] sm:$0x1]
        %v207 = vlaneseq
        %v208 = vshrl.u32 %v207, 7
        %v209 = vsub.s32 0, %v208
        %v210 = vrot.slane %v205, %v209
        %vm212 = vcmask 130048
        %v214 = vsel %vm212, %v200, 0
        %v217 = vsel %vm212, %v201, 0
        %v220 = vsel %vm212, %v202, 0
        %222 = vmatprep.subr.mxu0 0.0
        %223 = vmatpush1.msra.mxu0 %v203
        %224 = vmatprep.subr.mxu0 0.0
        %225 = vmatpush1.msra.mxu0 %v204
        %226 = vmatprep.subr.mxu0 0.0
        %227 = vmatpush1.msra.mxu0 0.0
        %228 = vmatprep.subr.mxu0 0.0
        %229 = vmatpush1.msra.mxu0 0.0
        %230 = vmatprep.subr.mxu0 0.0
        %231 = vmatpush1.msra.mxu0 0.0
        %232 = vmatprep.subr.mxu0 0.0
        %233 = vmatpush1.msra.mxu0 0.0
        %234 = vmatprep.subr.mxu0 0.0
        %235 = vmatpush1.msra.mxu0 0.0
        %236 = vmatprep.subr.mxu0 0.0
        %237 = vmatpush1.msra.mxu0 0.0
        %238 = vmatprep.subr.mxu0 0.0
        %239 = vmatpush1.msra.mxu0 0.0
        %240 = vmatprep.subr.mxu0 0.0
        %241 = vmatpush1.msra.mxu0 0.0
        %242 = vmatprep.subr.mxu0 0.0
        %243 = vmatpush1.msra.mxu0 0.0
        %244 = vmatprep.subr.mxu0 0.0
        %245 = vmatpush1.msra.mxu0 0.0
        %246 = vmatprep.subr.mxu0 0.0
        %247 = vmatpush1.msra.mxu0 0.0
        %248 = vmatprep.subr.mxu0 0.0
        %249 = vmatpush1.msra.mxu0 0.0
        %250 = vmatprep.subr.mxu0 0.0
        %251 = vmatpush1.msra.mxu0 0.0
        %252 = vmatprep.subr.mxu0 0.0
        %253 = vmatpush1.msra.mxu0 0.0
        %254 = vmatprep.subr.mxu0 0.0
        %255 = vmatpush1.msra.mxu0 0.0
        %256 = vmatprep.subr.mxu0 0.0
        %257 = vmatpush1.msra.mxu0 0.0
        %258 = vmatprep.subr.mxu0 0.0
        %259 = vmatpush1.msra.mxu0 0.0
        %260 = vmatprep.subr.mxu0 0.0
        %261 = vmatpush1.msra.mxu0 0.0
        %262 = vmatprep.subr.mxu0 0.0
        %263 = vmatpush1.msra.mxu0 0.0
        %264 = vmatprep.subr.mxu0 0.0
        %265 = vmatpush1.msra.mxu0 0.0
        %266 = vmatprep.subr.mxu0 0.0
        %267 = vmatpush1.msra.mxu0 0.0
        %268 = vmatprep.subr.mxu0 0.0
        %269 = vmatpush1.msra.mxu0 0.0
        %270 = vmatprep.subr.mxu0 0.0
        %271 = vmatpush1.msra.mxu0 0.0
        %272 = vmatprep.subr.mxu0 0.0
        %273 = vmatpush1.msra.mxu0 0.0
        %274 = vmatprep.subr.mxu0 0.0
        %275 = vmatpush1.msra.mxu0 0.0
        %276 = vmatprep.subr.mxu0 0.0
        %277 = vmatpush1.msra.mxu0 0.0
        %278 = vmatprep.subr.mxu0 0.0
        %279 = vmatpush1.msra.mxu0 0.0
        %280 = vmatprep.subr.mxu0 0.0
        %281 = vmatpush1.msra.mxu0 0.0
        %282 = vmatprep.subr.mxu0 0.0
        %283 = vmatpush1.msra.mxu0 0.0
        %284 = vmatprep.subr.mxu0 0.0
        %285 = vmatpush1.msra.mxu0 0.0
        %286 = vmatprep.mubr.f32.mxu0 0.0
        %287 = vmatmul.mubr.f32.gmra.mrb[0].mxu0 %v214
        %v288 = vpop.f32.mrb[0].mxu0
        %v289 = vadd.f32 %v210, %v288
        %v290 = vpop.f32.mrb[0].mxu0
        %291 = vmatprep.mubr.f32.mxu0 0.0
        %292 = vmatmul.mubr.f32.gmra.mrb[0].mxu0 %v217
        %v293 = vpop.f32.mrb[0].mxu0
        %v294 = vadd.f32 %v210, %v293
        %v295 = vpop.f32.mrb[0].mxu0
        %296 = vmatprep.mubr.f32.mxu0 0.0
        %297 = vmatmul.mubr.f32.gmra.mrb[0].mxu0 %v220
        %v298 = vpop.f32.mrb[0].mxu0
        %v299 = vadd.f32 %v210, %v298
        %v300 = vpop.f32.mrb[0].mxu0
        %301 = vdwg.mxu0
        %vm302 = vcmask 261120
        %303 = vst.msk [vmem:[%s188] sm:$0xff] %vm302, %v289
        %304 = vst.msk [vmem:[%s188 + $0x8] sm:$0xff] %vm302, %v294
        %305 = vst.msk [vmem:[%s188 + $0x10] sm:$0xff] %vm302, %v299
        %s306 = sand.u32 %s109, 1
        %s307 = scalar_lea.sflag [#allocation3], %s306
        %s308 = sand.u32 %s109, 1
        %s309 = smul.addr %s308, 24
        %s310 = scalar_lea.vmem [#allocation2], %s309
        // Predicated region
        $region33: #{tpu_custom_call.1} parent=31 // pred_check
          %p311 = pneg %p119
        $region34: #{tpu_custom_call.1} parent=31 // pred_check_branch
          %313 = sbr.rel (%p311) target = $region36
        $region35: #{tpu_custom_call.1} parent=31 // pred_region
          %s314 = smul.u32 3, %s22
          %s316 = ssub.s32 384, 384
          %317 = vsyncadd %s307, %s316
          %s318 = smul.addr %s21, 3
          %s319 = sadd.s32 %s314, %s318
          %s320 = smul.addr %s319, 128
          %s321 = scalar_lea.hbm %s3, %s320
          %s322 = sshll.u32 %s310, 4
          %s323 = int_to_ptr.vmem [resolvable:$true] %s322
          %328 = dma.vmem_to_hbm [thread:$0]  %s323, 384, %s321, %s307, 128, 128, 8
        $region36: #{tpu_custom_call.1} parent=31 // pred_fallthru
          _
      $region32: #{tpu_custom_call.1} parent=5 // pred_fallthru
        _
      %p329 = scmp.le.s32.totalorder 2, %s12
      // Predicated region
      $region37: #{tpu_custom_call.1} parent=5 // pred_check
        %p330 = pneg %p329
      $region38: #{tpu_custom_call.1} parent=5 // pred_check_branch
        %332 = sbr.rel (%p330) target = $region40
      $region39: #{tpu_custom_call.1} parent=5 // pred_region
        %s333 = ssub.s32 %s12, 2
        // Predicated region
        $region41: #{tpu_custom_call.1} parent=39 // pred_check
          %p334 = pneg %p125
        $region42: #{tpu_custom_call.1} parent=39 // pred_check_branch
          %336 = sbr.rel (%p334) target = $region44
        $region43: #{tpu_custom_call.1} parent=39 // pred_region
          %s337 = sand.u32 %s110, 1
          %s338 = scalar_lea.sflag [#allocation3], %s337
          %s339 = sand.u32 %s110, 1
          %s340 = smul.addr %s339, 24
          %s341 = scalar_lea.vmem [#allocation2], %s340
          %342 = dma.done %s338, 384
        $region44: #{tpu_custom_call.1} parent=39 // pred_fallthru
          _
      $region40: #{tpu_custom_call.1} parent=5 // pred_fallthru
        _
    $region6: #{tpu_custom_call.1} parent=1 // loop_footer
      %s16 = sadd.s32 1, %s12
    $region7: #{tpu_custom_call.1} parent=1 // loop_footer_branch
      %11 = sbr.rel target = $region3
    $region8: #{tpu_custom_call.1} parent=1 // loop_exit
      _
    %343 = vsyncpa [#allocation3], 1
    %s344 = scalar_lea.sflag [#allocation3], 1
    %345 = vsyncpa %s344, 1

</llo_original>
